<compile_context>
chip_gen: v6e
topology: v6e:2x2x1
jax: 0.10.0
libtpu: 0.0.40
codegen_flags: <defaults>
</compile_context>

<pallas_src>
import functools

import jax
import jax.numpy as jnp
from jax.experimental import pallas as pl
from jax.experimental.pallas import tpu as pltpu


# ---------------------------------------------------------------------------
# Pallas kernel: fused (proj+MLP1) -> FM terms -> MLP2 -> VPU logit, one tile.
# ---------------------------------------------------------------------------
def deepfm_kernel(h1, e, dm,
                  mv_ref, uv_ref, wp_ref, bp_ref, w2_ref, b2_ref, w3_ref,
                  out_ref, lhs_ref):
    # Assemble the contiguous matmul lhs in VMEM scratch (lane placement only),
    # then cast once to the compute dtype right before the MXU.
    lhs_ref[:, :dm] = mv_ref[...]
    lhs_ref[:, dm:] = uv_ref[...]
    lhs = lhs_ref[...].astype(wp_ref.dtype)

    # Single fused projection on the MXU (f32 accumulation), columns:
    #   [ h1_pre (h1) | m_sum (e) | u_sum (e) | fm_linear + b3 (1) ]
    proj = jnp.dot(lhs, wp_ref[...],
                   preferred_element_type=jnp.float32) + bp_ref[...]

    h = jnp.maximum(proj[:, :h1], 0.0)                 # relu(all_dense @ w1 + b1)
    m_sum = proj[:, h1:h1 + e]                         # sum_i m_i   (folded)
    u_sum = proj[:, h1 + e:h1 + 2 * e]                 # sum_j u_j   (folded)
    fm = proj[:, h1 + 2 * e:h1 + 2 * e + 1]            # fm_additive + b3

    # sum_{i,j} <m_i, u_j> == <sum_i m_i, sum_j u_j>
    fm_inter = jnp.sum(m_sum * u_sum, axis=-1, keepdims=True)

    # MLP layer 2 on the MXU.
    h = jnp.dot(h.astype(w2_ref.dtype), w2_ref[...],
                preferred_element_type=jnp.float32) + b2_ref[...]
    h = jnp.maximum(h, 0.0)

    # Final (h2 -> 1) layer on the VPU/XLU instead of an N=1 MXU matmul.
    logit = jnp.sum(h * w3_ref[...], axis=-1, keepdims=True)

    out_ref[...] = (logit + fm + fm_inter).astype(out_ref.dtype)


# ---------------------------------------------------------------------------
# Wrapper-side parameter fusion + pallas_call with a batch grid
# ---------------------------------------------------------------------------
def _round_up(x, m):
    return (x + m - 1) // m * m


def build_fused_params(wm, bm, wu, bu, w1, b1, w2, b2, w3, b3, *, nm, nu, e):
    """Fold the two embedding Linears into MLP layer 1 and into the FM columns.

    Returns (wp, bp, w2, b2, w3_row) where the kernel's first matmul output is
    [relu-pre-activation of layer1 | sum_i m_i | sum_j u_j | fm_linear + b3].
    """
    # TODO(synk): only the 3-Linear MLP config (first Linear present, i.e.
    # mlp_input_size != mlp_sizes[0]) is implemented; deeper/shorter mlp_sizes
    # would need extra resident-weight inputs.
    dm, du = wm.shape[0], wu.shape[0]
    me, ue = nm * e, nu * e
    h1 = w1.shape[1]

    wm_emb, wu_emb = wm[:, :me], wu[:, :ue]
    bm_emb, bu_emb = bm[0, :me], bu[0, :ue]

    # Fold embedding projection into MLP layer 1 (no nonlinearity in between).
    w1_m = wm_emb @ w1[:me]                              # (dm, h1)
    w1_u = wu_emb @ w1[me:]                              # (du, h1)
    b1_f = bm_emb @ w1[:me] + bu_emb @ w1[me:] + b1[0]   # (h1,)

    # Per-field embedding sums for the FM pairwise term.
    m_sum_w = wm_emb.reshape(dm, nm, e).sum(axis=1)      # (dm, e)
    u_sum_w = wu_emb.reshape(du, nu, e).sum(axis=1)      # (du, e)
    m_sum_b = bm_emb.reshape(nm, e).sum(axis=0)
    u_sum_b = bu_emb.reshape(nu, e).sum(axis=0)

    p = h1 + 2 * e + 1
    wp = jnp.zeros((dm + du, p), jnp.float32)
    wp = wp.at[:dm, :h1].set(w1_m)
    wp = wp.at[dm:, :h1].set(w1_u)
    wp = wp.at[:dm, h1:h1 + e].set(m_sum_w)
    wp = wp.at[dm:, h1 + e:h1 + 2 * e].set(u_sum_w)
    wp = wp.at[:dm, p - 1].set(wm[:, me])                # FM linear (movie)
    wp = wp.at[dm:, p - 1].set(wu[:, ue])                # FM linear (user)

    bp = jnp.concatenate([
        b1_f, m_sum_b, u_sum_b,
        (bm[0, me] + bu[0, ue] + b3[0, 0])[None],        # fold b3 in here
    ])[None, :]

    w3_row = w3.reshape(1, -1).astype(jnp.float32)       # (1, h2) VPU epilogue
    return wp, bp, w2, b2, w3_row


def _choose_tile(b, align, max_tile_b, min_steps):
    b_al = _round_up(b, align)
    n_steps = max(min_steps, pl.cdiv(b_al, max_tile_b))
    return max(align, _round_up(pl.cdiv(b_al, n_steps), align))


def deepfm_forward(movie_vectors, user_vectors, fused, *, e,
                   tile_b=None, max_tile_b=8192,
                   compute_dtype=jnp.bfloat16):
    wp, bp, w2, b2, w3_row = fused
    b, dm = movie_vectors.shape
    du = user_vectors.shape[1]
    h1 = w2.shape[0]

    # --- batch tiling: >=4 grid steps (2 per TC on v7x), small padding ------
    if tile_b is None:
        tile_b = _choose_tile(b, align=16, max_tile_b=max_tile_b, min_steps=4)
    else:
        tile_b = max(8, _round_up(min(tile_b, _round_up(b, 8)), 8))
    b_pad = _round_up(b, tile_b)
    if b_pad != b:
        pad = ((0, b_pad - b), (0, 0))
        movie_vectors = jnp.pad(movie_vectors, pad)
        user_vectors = jnp.pad(user_vectors, pad)

    # bf16 matmul operands (weights cast once, lhs cast in-kernel);
    # biases / accumulation / epilogue stay f32.
    wp_c = wp.astype(compute_dtype)
    w2_c = w2.astype(compute_dtype)

    def resident(arr):  # full-shape block, same tile every grid step
        shape = tuple(arr.shape)
        return pl.BlockSpec(shape, lambda i, _n=len(shape): (0,) * _n)

    kernel = functools.partial(deepfm_kernel, h1, e, dm)
    out = pl.pallas_call(
        kernel,
        out_shape=jax.ShapeDtypeStruct((b_pad, 1), jnp.float32),
        grid_spec=pltpu.PrefetchScalarGridSpec(
            num_scalar_prefetch=0,
            grid=(b_pad // tile_b,),
            in_specs=[
                pl.BlockSpec((tile_b, dm), lambda i: (i, 0)),
                pl.BlockSpec((tile_b, du), lambda i: (i, 0)),
                resident(wp_c), resident(bp),
                resident(w2_c), resident(b2), resident(w3_row),
            ],
            out_specs=pl.BlockSpec((tile_b, 1), lambda i: (i, 0)),
            scratch_shapes=[pltpu.VMEM((tile_b, dm + du), jnp.float32)],
        ),
        compiler_params=pltpu.CompilerParams(
            dimension_semantics=("parallel",),      # shard tiles across TCs (v7x)
            vmem_limit_bytes=32 * 1024 * 1024,      # safe on v5e/v6e/v7x
        ),
    )(movie_vectors, user_vectors, wp_c, bp, w2_c, b2, w3_row)
    return out[:b]


# ---------------------------------------------------------------------------
# Deterministic parameter construction (PyTorch Linear-style uniform init)
# ---------------------------------------------------------------------------
def linear_init(key, fan_in, fan_out):
    kw, kb = jax.random.split(key)
    bound = 1.0 / jnp.sqrt(fan_in)
    w = jax.random.uniform(kw, (fan_in, fan_out), jnp.float32, -bound, bound)
    b = jax.random.uniform(kb, (1, fan_out), jnp.float32, -bound, bound)
    return w, b


def reference_forward(mv, uv, p, *, nm, nu, e):
    """Pure-JAX reference mirroring the PyTorch module exactly."""
    (wm, bm, wu, bu, w1, b1, w2, b2, w3, b3) = p
    bsz = mv.shape[0]
    md = mv @ wm + bm
    ud = uv @ wu + bu
    fm_add = md[:, -1] + ud[:, -1]
    m_split = md[:, :-1].reshape(bsz, nm, e)
    u_split = ud[:, :-1].reshape(bsz, nu, e)
    fm_inter = jnp.einsum('bik,bjk->bij', m_split, u_split).reshape(bsz, -1)
    all_dense = jnp.concatenate([md[:, :-1], ud[:, :-1]], axis=-1)
    h = jnp.maximum(all_dense @ w1 + b1, 0.0)
    h = jnp.maximum(h @ w2 + b2, 0.0)
    logit = h @ w3 + b3
    return logit + fm_add[:, None] + fm_inter.sum(axis=-1, keepdims=True)


if __name__ == "__main__":
    # Small, forward-consistent config (first MLP Linear present: 40 != 64).
    B = 64
    movie_vector_size = 32
    user_vector_size = 24
    num_dense_movie = 3
    num_dense_user = 2
    E = 8                       # dense_embedding_size
    mlp_sizes = [64, 32, 1]
    mlp_in = (num_dense_movie + num_dense_user) * E   # 40

    key = jax.random.PRNGKey(0)
    keys = jax.random.split(key, 8)

    mv = jax.random.normal(keys[0], (B, movie_vector_size), jnp.float32)
    uv = jax.random.normal(keys[1], (B, user_vector_size), jnp.float32)

    wm, bm = linear_init(keys[2], movie_vector_size, E * num_dense_movie + 1)
    wu, bu = linear_init(keys[3], user_vector_size, E * num_dense_user + 1)
    w1, b1 = linear_init(keys[4], mlp_in, mlp_sizes[0])
    w2, b2 = linear_init(keys[5], mlp_sizes[0], mlp_sizes[1])
    w3, b3 = linear_init(keys[6], mlp_sizes[1], mlp_sizes[2])

    raw = (wm, bm, wu, bu, w1, b1, w2, b2, w3, b3)
    fused = build_fused_params(*raw, nm=num_dense_movie, nu=num_dense_user, e=E)

    ref = reference_forward(mv, uv, raw, nm=num_dense_movie,
                            nu=num_dense_user, e=E)

    # f32 matmul operands: small explicit tile to exercise the grid (4 steps).
    out = deepfm_forward(mv, uv, fused, e=E, tile_b=16,
                         compute_dtype=jnp.float32)
    out = jax.block_until_ready(out)
    assert out.shape == (B, 1)
    assert jnp.allclose(out, ref, atol=5e-4, rtol=5e-4), \
        float(jnp.abs(out - ref).max())

    # Default path: bf16 matmul operands, auto batch tiling (>=4 grid steps),
    # f32 accumulation / biases / epilogue.
    out_bf16 = deepfm_forward(mv, uv, fused, e=E)
    out_bf16 = jax.block_until_ready(out_bf16)
    assert out_bf16.shape == (B, 1)
    assert bool(jnp.all(jnp.isfinite(out_bf16)))
    assert jnp.allclose(out_bf16, ref, atol=2.5e-1, rtol=5e-2), \
        float(jnp.abs(out_bf16 - ref).max())

    print("KERNEL_OK")
</pallas_src>

<mosaic_0001>
module attributes {stable_mosaic.version = 11 : i64} {
  func.func @deepfm_kernel(%arg0: i32, %arg1: memref<16x32xf32, #tpu.memory_space<vmem>>, %arg2: memref<16x24xf32, #tpu.memory_space<vmem>>, %arg3: memref<56x81xf32, #tpu.memory_space<vmem>>, %arg4: memref<1x81xf32, #tpu.memory_space<vmem>>, %arg5: memref<64x32xf32, #tpu.memory_space<vmem>>, %arg6: memref<1x32xf32, #tpu.memory_space<vmem>>, %arg7: memref<1x32xf32, #tpu.memory_space<vmem>>, %arg8: memref<16x1xf32, #tpu.memory_space<vmem>>, %arg9: memref<16x56xf32, #tpu.memory_space<vmem>>) attributes {dimension_semantics = [#tpu.dimension_semantics<parallel>], iteration_bounds = array<i64: 4>, scalar_prefetch = 0 : i64, scratch_operands = 1 : i64, tpu.core_type = #tpu.core_type<tc>, window_params = [{transform_indices = @transform_0, window_bounds = array<i64: 16, 32>}, {transform_indices = @transform_1, window_bounds = array<i64: 16, 24>}, {pipeline_mode = #tpu.pipeline_mode<synchronous>, transform_indices = @transform_2, window_bounds = array<i64: 56, 81>}, {pipeline_mode = #tpu.pipeline_mode<synchronous>, transform_indices = @transform_3, window_bounds = array<i64: 1, 81>}, {pipeline_mode = #tpu.pipeline_mode<synchronous>, transform_indices = @transform_4, window_bounds = array<i64: 64, 32>}, {pipeline_mode = #tpu.pipeline_mode<synchronous>, transform_indices = @transform_5, window_bounds = array<i64: 1, 32>}, {pipeline_mode = #tpu.pipeline_mode<synchronous>, transform_indices = @transform_6, window_bounds = array<i64: 1, 32>}, {transform_indices = @transform_7, window_bounds = array<i64: 16, 1>}]} {
    %c0 = arith.constant 0 : index
    %c0_0 = arith.constant 0 : index
    %0 = vector.load %arg1[%c0, %c0_0] : memref<16x32xf32, #tpu.memory_space<vmem>>, vector<16x32xf32>
    %c0_1 = arith.constant 0 : index
    %c0_2 = arith.constant 0 : index
    %1 = vector.load %arg9[%c0_1, %c0_2] : memref<16x56xf32, #tpu.memory_space<vmem>>, vector<16x32xf32>
    tpu.vector_store %arg9[%c0_1, %c0_2], %0 {strides = array<i32>} : memref<16x56xf32, #tpu.memory_space<vmem>>, vector<16x32xf32>,
    %c0_3 = arith.constant 0 : index
    %c0_4 = arith.constant 0 : index
    %2 = vector.load %arg2[%c0_3, %c0_4] : memref<16x24xf32, #tpu.memory_space<vmem>>, vector<16x24xf32>
    %c0_5 = arith.constant 0 : index
    %c32 = arith.constant 32 : index
    %3 = vector.load %arg9[%c0_5, %c32] : memref<16x56xf32, #tpu.memory_space<vmem>>, vector<16x24xf32>
    tpu.vector_store %arg9[%c0_5, %c32], %2 {strides = array<i32>} : memref<16x56xf32, #tpu.memory_space<vmem>>, vector<16x24xf32>,
    %c0_6 = arith.constant 0 : index
    %c0_7 = arith.constant 0 : index
    %4 = vector.load %arg9[%c0_6, %c0_7] : memref<16x56xf32, #tpu.memory_space<vmem>>, vector<16x56xf32>
    %c0_8 = arith.constant 0 : index
    %c0_9 = arith.constant 0 : index
    %5 = vector.load %arg3[%c0_8, %c0_9] : memref<56x81xf32, #tpu.memory_space<vmem>>, vector<56x81xf32>
    %cst = arith.constant dense<0.000000e+00> : vector<16x81xf32>
    %6 = tpu.matmul %4, %5, %cst {dimension_numbers = #tpu.dot_dimension_numbers<[1], [0], [0], [1], [0, 0, 1, 1], [], []>} : vector<16x56xf32>, vector<56x81xf32>, vector<16x81xf32> -> vector<16x81xf32>
    %c0_10 = arith.constant 0 : index
    %c0_11 = arith.constant 0 : index
    %7 = vector.load %arg4[%c0_10, %c0_11] : memref<1x81xf32, #tpu.memory_space<vmem>>, vector<1x81xf32>
    %8 = vector.broadcast %7 : vector<1x81xf32> to vector<16x81xf32>
    %9 = arith.addf %6, %8 : vector<16x81xf32>
    %10 = vector.extract_strided_slice %9 {offsets = [0, 0], sizes = [16, 64], strides = [1, 1]} : vector<16x81xf32> to vector<16x64xf32>
    %cst_12 = arith.constant 0.000000e+00 : f32
    %11 = vector.broadcast %cst_12 : f32 to vector<16x64xf32>
    %12 = arith.maximumf %10, %11 : vector<16x64xf32>
    %13 = vector.extract_strided_slice %9 {offsets = [0, 64], sizes = [16, 8], strides = [1, 1]} : vector<16x81xf32> to vector<16x8xf32>
    %14 = vector.extract_strided_slice %9 {offsets = [0, 72], sizes = [16, 8], strides = [1, 1]} : vector<16x81xf32> to vector<16x8xf32>
    %15 = vector.extract_strided_slice %9 {offsets = [0, 80], sizes = [16, 1], strides = [1, 1]} : vector<16x81xf32> to vector<16x1xf32>
    %16 = arith.mulf %13, %14 : vector<16x8xf32>
    %cst_13 = arith.constant dense<0.000000e+00> : vector<16xf32>
    %17 = vector.multi_reduction <add>, %16, %cst_13 [1] : vector<16x8xf32> to vector<16xf32>
    %18 = vector.shape_cast %17 : vector<16xf32> to vector<16x1xf32>
    %c0_14 = arith.constant 0 : index
    %c0_15 = arith.constant 0 : index
    %19 = vector.load %arg5[%c0_14, %c0_15] : memref<64x32xf32, #tpu.memory_space<vmem>>, vector<64x32xf32>
    %cst_16 = arith.constant dense<0.000000e+00> : vector<16x32xf32>
    %20 = tpu.matmul %12, %19, %cst_16 {dimension_numbers = #tpu.dot_dimension_numbers<[1], [0], [0], [1], [0, 0, 1, 1], [], []>} : vector<16x64xf32>, vector<64x32xf32>, vector<16x32xf32> -> vector<16x32xf32>
    %c0_17 = arith.constant 0 : index
    %c0_18 = arith.constant 0 : index
    %21 = vector.load %arg6[%c0_17, %c0_18] : memref<1x32xf32, #tpu.memory_space<vmem>>, vector<1x32xf32>
    %22 = vector.broadcast %21 : vector<1x32xf32> to vector<16x32xf32>
    %23 = arith.addf %20, %22 : vector<16x32xf32>
    %cst_19 = arith.constant 0.000000e+00 : f32
    %24 = vector.broadcast %cst_19 : f32 to vector<16x32xf32>
    %25 = arith.maximumf %23, %24 : vector<16x32xf32>
    %c0_20 = arith.constant 0 : index
    %c0_21 = arith.constant 0 : index
    %26 = vector.load %arg7[%c0_20, %c0_21] : memref<1x32xf32, #tpu.memory_space<vmem>>, vector<1x32xf32>
    %27 = vector.broadcast %26 : vector<1x32xf32> to vector<16x32xf32>
    %28 = arith.mulf %25, %27 : vector<16x32xf32>
    %cst_22 = arith.constant dense<0.000000e+00> : vector<16xf32>
    %29 = vector.multi_reduction <add>, %28, %cst_22 [1] : vector<16x32xf32> to vector<16xf32>
    %30 = vector.shape_cast %29 : vector<16xf32> to vector<16x1xf32>
    %31 = arith.addf %30, %15 : vector<16x1xf32>
    %32 = arith.addf %31, %18 : vector<16x1xf32>
    %c0_23 = arith.constant 0 : index
    %c0_24 = arith.constant 0 : index
    %33 = vector.load %arg8[%c0_23, %c0_24] : memref<16x1xf32, #tpu.memory_space<vmem>>, vector<16x1xf32>
    tpu.vector_store %arg8[%c0_23, %c0_24], %32 {strides = array<i32>} : memref<16x1xf32, #tpu.memory_space<vmem>>, vector<16x1xf32>,
    return
  }
  func.func @transform_0(%arg0: i32) -> (i32, i32) {
    %c0_i32 = arith.constant 0 : i32
    %c0_i32_0 = arith.constant 0 : i32
    return %arg0, %c0_i32 : i32, i32
  }
  func.func @transform_1(%arg0: i32) -> (i32, i32) {
    %c0_i32 = arith.constant 0 : i32
    %c0_i32_0 = arith.constant 0 : i32
    return %arg0, %c0_i32 : i32, i32
  }
  func.func @transform_2(%arg0: i32) -> (i32, i32) {
    %c0_i32 = arith.constant 0 : i32
    %c0_i32_0 = arith.constant 0 : i32
    %c0_i32_1 = arith.constant 0 : i32
    return %c0_i32, %c0_i32_0 : i32, i32
  }
  func.func @transform_3(%arg0: i32) -> (i32, i32) {
    %c0_i32 = arith.constant 0 : i32
    %c0_i32_0 = arith.constant 0 : i32
    %c0_i32_1 = arith.constant 0 : i32
    return %c0_i32, %c0_i32_0 : i32, i32
  }
  func.func @transform_4(%arg0: i32) -> (i32, i32) {
    %c0_i32 = arith.constant 0 : i32
    %c0_i32_0 = arith.constant 0 : i32
    %c0_i32_1 = arith.constant 0 : i32
    return %c0_i32, %c0_i32_0 : i32, i32
  }
  func.func @transform_5(%arg0: i32) -> (i32, i32) {
    %c0_i32 = arith.constant 0 : i32
    %c0_i32_0 = arith.constant 0 : i32
    %c0_i32_1 = arith.constant 0 : i32
    return %c0_i32, %c0_i32_0 : i32, i32
  }
  func.func @transform_6(%arg0: i32) -> (i32, i32) {
    %c0_i32 = arith.constant 0 : i32
    %c0_i32_0 = arith.constant 0 : i32
    %c0_i32_1 = arith.constant 0 : i32
    return %c0_i32, %c0_i32_0 : i32, i32
  }
  func.func @transform_7(%arg0: i32) -> (i32, i32) {
    %c0_i32 = arith.constant 0 : i32
    %c0_i32_0 = arith.constant 0 : i32
    return %arg0, %c0_i32 : i32, i32
  }
}

</mosaic_0001>

<llo_original>
// kernel: tpu_custom_call.1
$region0: #{tpu_custom_call.1}
  #allocation0 [shape = 'u32[]', space=smem, size = 0x4, offset = 0x4, fixed_abs, tag = 'smem constant byte address 0x4 - core index']
  #allocation1 [shape = 'u32[144,128]{1,0:T(1,128)}', space=vmem, size = 0x12000, scoped, tag = 'internal scratch']
  #allocation2 [shape = 'f32[16,56]{1,0:T(8,128)}', space=vmem, size = 0x2000, scoped, tag = 'scratch operand']
  %s0 = inlined_call_operand.vmem [shape: f32[64,32], index: 0, kind: input, shape index: {}]
  %s1 = inlined_call_operand.vmem [shape: f32[64,24], index: 1, kind: input, shape index: {}]
  %s2 = inlined_call_operand.vmem [shape: f32[56,81], index: 2, kind: input, shape index: {}]
  %s3 = inlined_call_operand.vmem [shape: f32[1,81], index: 3, kind: input, shape index: {}]
  %s4 = inlined_call_operand.vmem [shape: f32[64,32], index: 4, kind: input, shape index: {}]
  %s5 = inlined_call_operand.vmem [shape: f32[1,32], index: 5, kind: input, shape index: {}]
  %s6 = inlined_call_operand.vmem [shape: f32[1,32], index: 6, kind: input, shape index: {}]
  %s7 = inlined_call_operand.vmem [shape: f32[64,1], index: 7, kind: output, shape index: {}]
  %s8 = sld [smem:[#allocation0]]
  $region61: #{tpu_custom_call.1} parent=0
    _
  %s10 = ssub.s32 1, %s8
  %s11 = scalar_select 0, %s10, %s8
  loop: start=0, step=1, limit=6
  $region2: #{tpu_custom_call.1} parent=0 // loop_pre_header
    _
  $region3: #{tpu_custom_call.1} parent=0 // loop_header
    %s13 = sphi 0, %s17
    %p14 = scmp.ge.s32.totalorder %s13, 6
    %s23 = sphi 0, %s25
    %s26 = sphi 0, %s23
    %s27 = sphi 0, %s26
    %s43 = sphi 0, %s27
    %s49 = sphi 0, %s51
    %s52 = sphi 0, %s49
    %s53 = sphi 0, %s52
    %s69 = sphi 0, %s53
    %s73 = sphi 0, %s73
    %s75 = sphi 0, %s73
    %s76 = sphi 0, %s75
    %s90 = sphi 0, %s76
    %s94 = sphi 0, %s94
    %s96 = sphi 0, %s94
    %s97 = sphi 0, %s96
    %s111 = sphi 0, %s97
    %s115 = sphi 0, %s115
    %s117 = sphi 0, %s115
    %s118 = sphi 0, %s117
    %s132 = sphi 0, %s118
    %s136 = sphi 0, %s136
    %s138 = sphi 0, %s136
    %s139 = sphi 0, %s138
    %s153 = sphi 0, %s139
    %s157 = sphi 0, %s157
    %s159 = sphi 0, %s157
    %s160 = sphi 0, %s159
    %s174 = sphi 0, %s160
    %s180 = sphi 0, %s182
    %s183 = sphi 0, %s180
    %s184 = sphi 0, %s183
    %s200 = sphi 0, %s184
  $region4: #{tpu_custom_call.1} parent=0 // loop_header_branch
    %16 = sbr.rel (%p14) target = $region8
  $region5: #{tpu_custom_call.1} parent=0 // loop_body
    %s18 = ssub.s32 %s13, 1
    %s19 = ssub.s32 %s13, 2
    %s20 = sadd.s32 %s13, 1
    %s21 = ssub.s32 %s13, %s20
    %p22 = scmp.eq.s32.totalorder %s21, 0
    %s24 = sadd.s32 %s23, 1
    %s25 = scalar_select %p22, %s23, %s24
    %p28 = pneg %p22
    %p29 = scmp.eq.s32.totalorder %s13, 3
    %p30 = por %p28, %p29
    %p31 = scmp.ne.s32.totalorder %s23, %s26
    %p32 = scmp.eq.s32.totalorder %s13, 0
    %p33 = por %p31, %p32
    %p34 = scmp.ne.s32.totalorder %s23, %s26
    %p35 = scmp.eq.s32.totalorder %s18, 3
    %p36 = por %p34, %p35
    %p37 = scmp.ne.s32.totalorder %s26, %s27
    %p38 = scmp.eq.s32.totalorder %s18, 0
    %p39 = por %p37, %p38
    %p40 = scmp.ne.s32.totalorder %s26, %s27
    %p41 = scmp.eq.s32.totalorder %s19, 3
    %p42 = por %p40, %p41
    %p44 = scmp.ne.s32.totalorder %s27, %s43
    %p45 = scmp.eq.s32.totalorder %s19, 0
    %p46 = por %p44, %p45
    %s47 = ssub.s32 %s13, %s20
    %p48 = scmp.eq.s32.totalorder %s47, 0
    %s50 = sadd.s32 %s49, 1
    %s51 = scalar_select %p48, %s49, %s50
    %p54 = pneg %p48
    %p55 = scmp.eq.s32.totalorder %s13, 3
    %p56 = por %p54, %p55
    %p57 = scmp.ne.s32.totalorder %s49, %s52
    %p58 = scmp.eq.s32.totalorder %s13, 0
    %p59 = por %p57, %p58
    %p60 = scmp.ne.s32.totalorder %s49, %s52
    %p61 = scmp.eq.s32.totalorder %s18, 3
    %p62 = por %p60, %p61
    %p63 = scmp.ne.s32.totalorder %s52, %s53
    %p64 = scmp.eq.s32.totalorder %s18, 0
    %p65 = por %p63, %p64
    %p66 = scmp.ne.s32.totalorder %s52, %s53
    %p67 = scmp.eq.s32.totalorder %s19, 3
    %p68 = por %p66, %p67
    %p70 = scmp.ne.s32.totalorder %s53, %s69
    %p71 = scmp.eq.s32.totalorder %s19, 0
    %p72 = por %p70, %p71
    %s74 = sadd.s32 %s73, 1
    %p77 = scmp.eq.s32.totalorder %s13, 3
    %p78 = scmp.ne.s32.totalorder %s73, %s75
    %p79 = scmp.eq.s32.totalorder %s13, 0
    %p80 = por %p78, %p79
    %p81 = scmp.ne.s32.totalorder %s73, %s75
    %p82 = scmp.eq.s32.totalorder %s18, 3
    %p83 = por %p81, %p82
    %p84 = scmp.ne.s32.totalorder %s75, %s76
    %p85 = scmp.eq.s32.totalorder %s18, 0
    %p86 = por %p84, %p85
    %p87 = scmp.ne.s32.totalorder %s75, %s76
    %p88 = scmp.eq.s32.totalorder %s19, 3
    %p89 = por %p87, %p88
    %p91 = scmp.ne.s32.totalorder %s76, %s90
    %p92 = scmp.eq.s32.totalorder %s19, 0
    %p93 = por %p91, %p92
    %s95 = sadd.s32 %s94, 1
    %p98 = scmp.eq.s32.totalorder %s13, 3
    %p99 = scmp.ne.s32.totalorder %s94, %s96
    %p100 = scmp.eq.s32.totalorder %s13, 0
    %p101 = por %p99, %p100
    %p102 = scmp.ne.s32.totalorder %s94, %s96
    %p103 = scmp.eq.s32.totalorder %s18, 3
    %p104 = por %p102, %p103
    %p105 = scmp.ne.s32.totalorder %s96, %s97
    %p106 = scmp.eq.s32.totalorder %s18, 0
    %p107 = por %p105, %p106
    %p108 = scmp.ne.s32.totalorder %s96, %s97
    %p109 = scmp.eq.s32.totalorder %s19, 3
    %p110 = por %p108, %p109
    %p112 = scmp.ne.s32.totalorder %s97, %s111
    %p113 = scmp.eq.s32.totalorder %s19, 0
    %p114 = por %p112, %p113
    %s116 = sadd.s32 %s115, 1
    %p119 = scmp.eq.s32.totalorder %s13, 3
    %p120 = scmp.ne.s32.totalorder %s115, %s117
    %p121 = scmp.eq.s32.totalorder %s13, 0
    %p122 = por %p120, %p121
    %p123 = scmp.ne.s32.totalorder %s115, %s117
    %p124 = scmp.eq.s32.totalorder %s18, 3
    %p125 = por %p123, %p124
    %p126 = scmp.ne.s32.totalorder %s117, %s118
    %p127 = scmp.eq.s32.totalorder %s18, 0
    %p128 = por %p126, %p127
    %p129 = scmp.ne.s32.totalorder %s117, %s118
    %p130 = scmp.eq.s32.totalorder %s19, 3
    %p131 = por %p129, %p130
    %p133 = scmp.ne.s32.totalorder %s118, %s132
    %p134 = scmp.eq.s32.totalorder %s19, 0
    %p135 = por %p133, %p134
    %s137 = sadd.s32 %s136, 1
    %p140 = scmp.eq.s32.totalorder %s13, 3
    %p141 = scmp.ne.s32.totalorder %s136, %s138
    %p142 = scmp.eq.s32.totalorder %s13, 0
    %p143 = por %p141, %p142
    %p144 = scmp.ne.s32.totalorder %s136, %s138
    %p145 = scmp.eq.s32.totalorder %s18, 3
    %p146 = por %p144, %p145
    %p147 = scmp.ne.s32.totalorder %s138, %s139
    %p148 = scmp.eq.s32.totalorder %s18, 0
    %p149 = por %p147, %p148
    %p150 = scmp.ne.s32.totalorder %s138, %s139
    %p151 = scmp.eq.s32.totalorder %s19, 3
    %p152 = por %p150, %p151
    %p154 = scmp.ne.s32.totalorder %s139, %s153
    %p155 = scmp.eq.s32.totalorder %s19, 0
    %p156 = por %p154, %p155
    %s158 = sadd.s32 %s157, 1
    %p161 = scmp.eq.s32.totalorder %s13, 3
    %p162 = scmp.ne.s32.totalorder %s157, %s159
    %p163 = scmp.eq.s32.totalorder %s13, 0
    %p164 = por %p162, %p163
    %p165 = scmp.ne.s32.totalorder %s157, %s159
    %p166 = scmp.eq.s32.totalorder %s18, 3
    %p167 = por %p165, %p166
    %p168 = scmp.ne.s32.totalorder %s159, %s160
    %p169 = scmp.eq.s32.totalorder %s18, 0
    %p170 = por %p168, %p169
    %p171 = scmp.ne.s32.totalorder %s159, %s160
    %p172 = scmp.eq.s32.totalorder %s19, 3
    %p173 = por %p171, %p172
    %p175 = scmp.ne.s32.totalorder %s160, %s174
    %p176 = scmp.eq.s32.totalorder %s19, 0
    %p177 = por %p175, %p176
    %s178 = ssub.s32 %s13, %s20
    %p179 = scmp.eq.s32.totalorder %s178, 0
    %s181 = sadd.s32 %s180, 1
    %s182 = scalar_select %p179, %s180, %s181
    %p185 = pneg %p179
    %p186 = scmp.eq.s32.totalorder %s13, 3
    %p187 = por %p185, %p186
    %p188 = scmp.ne.s32.totalorder %s180, %s183
    %p189 = scmp.eq.s32.totalorder %s13, 0
    %p190 = por %p188, %p189
    %p191 = scmp.ne.s32.totalorder %s180, %s183
    %p192 = scmp.eq.s32.totalorder %s18, 3
    %p193 = por %p191, %p192
    %p194 = scmp.ne.s32.totalorder %s183, %s184
    %p195 = scmp.eq.s32.totalorder %s18, 0
    %p196 = por %p194, %p195
    %p197 = scmp.ne.s32.totalorder %s183, %s184
    %p198 = scmp.eq.s32.totalorder %s19, 3
    %p199 = por %p197, %p198
    %p201 = scmp.ne.s32.totalorder %s184, %s200
    %p202 = scmp.eq.s32.totalorder %s19, 0
    %p203 = por %p201, %p202
    %p204 = scmp.le.s32.totalorder 1, %s13
    %p205 = scmp.lt.s32.totalorder %s13, 5
    %p206 = pnand %p204, %p205
    %p207 = pneg %p206
    // Predicated region
    $region9: #{tpu_custom_call.1} parent=5 // pred_check
      _
    $region10: #{tpu_custom_call.1} parent=5 // pred_check_branch
      %209 = sbr.rel (%p206) target = $region12
    $region11: #{tpu_custom_call.1} parent=5 // pred_region
      %s210 = ssub.s32 %s13, 1
      // Predicated region
      $region13: #{tpu_custom_call.1} parent=11 // pred_check
        %p211 = pneg %p86
      $region14: #{tpu_custom_call.1} parent=11 // pred_check_branch
        %213 = sbr.rel (%p211) target = $region16
      $region15: #{tpu_custom_call.1} parent=11 // pred_region
        _
      $region16: #{tpu_custom_call.1} parent=11 // pred_fallthru
        _
      // Predicated region
      $region17: #{tpu_custom_call.1} parent=11 // pred_check
        %p214 = pneg %p107
      $region18: #{tpu_custom_call.1} parent=11 // pred_check_branch
        %216 = sbr.rel (%p214) target = $region20
      $region19: #{tpu_custom_call.1} parent=11 // pred_region
        _
      $region20: #{tpu_custom_call.1} parent=11 // pred_fallthru
        _
      // Predicated region
      $region21: #{tpu_custom_call.1} parent=11 // pred_check
        %p217 = pneg %p128
      $region22: #{tpu_custom_call.1} parent=11 // pred_check_branch
        %219 = sbr.rel (%p217) target = $region24
      $region23: #{tpu_custom_call.1} parent=11 // pred_region
        _
      $region24: #{tpu_custom_call.1} parent=11 // pred_fallthru
        _
      // Predicated region
      $region25: #{tpu_custom_call.1} parent=11 // pred_check
        %p220 = pneg %p149
      $region26: #{tpu_custom_call.1} parent=11 // pred_check_branch
        %222 = sbr.rel (%p220) target = $region28
      $region27: #{tpu_custom_call.1} parent=11 // pred_region
        _
      $region28: #{tpu_custom_call.1} parent=11 // pred_fallthru
        _
      // Predicated region
      $region29: #{tpu_custom_call.1} parent=11 // pred_check
        %p223 = pneg %p170
      $region30: #{tpu_custom_call.1} parent=11 // pred_check_branch
        %225 = sbr.rel (%p223) target = $region32
      $region31: #{tpu_custom_call.1} parent=11 // pred_region
        _
      $region32: #{tpu_custom_call.1} parent=11 // pred_fallthru
        _
    $region12: #{tpu_custom_call.1} parent=5 // pred_fallthru
      _
    %p226 = scmp.lt.s32.totalorder %s13, 4
    // Predicated region
    $region33: #{tpu_custom_call.1} parent=5 // pred_check
      %p227 = pneg %p226
    $region34: #{tpu_custom_call.1} parent=5 // pred_check_branch
      %229 = sbr.rel (%p227) target = $region36
    $region35: #{tpu_custom_call.1} parent=5 // pred_region
      // Predicated region
      $region37: #{tpu_custom_call.1} parent=35 // pred_check
        %p230 = pneg %p33
      $region38: #{tpu_custom_call.1} parent=35 // pred_check_branch
        %232 = sbr.rel (%p230) target = $region40
      $region39: #{tpu_custom_call.1} parent=35 // pred_region
        %s233 = smul.u32 2, %s13
        %p234 = scmp.lt.s32.totalorder %s233, 7
        %s235 = scalar_select %p234, %s233, 7
        %s236 = smul.addr %s235, 8
        %s237 = scalar_lea.vmem %s0, %s236
        %s238 = smul.u32 2, %s13
      $region40: #{tpu_custom_call.1} parent=35 // pred_fallthru
        _
      // Predicated region
      $region41: #{tpu_custom_call.1} parent=35 // pred_check
        %p239 = pneg %p59
      $region42: #{tpu_custom_call.1} parent=35 // pred_check_branch
        %241 = sbr.rel (%p239) target = $region44
      $region43: #{tpu_custom_call.1} parent=35 // pred_region
        %s242 = smul.u32 2, %s13
        %p243 = scmp.lt.s32.totalorder %s242, 7
        %s244 = scalar_select %p243, %s242, 7
        %s245 = smul.addr %s244, 8
        %s246 = scalar_lea.vmem %s1, %s245
        %s247 = smul.u32 2, %s13
      $region44: #{tpu_custom_call.1} parent=35 // pred_fallthru
        _
    $region36: #{tpu_custom_call.1} parent=5 // pred_fallthru
      _
    %p248 = scmp.le.s32.totalorder 1, %s13
    %p249 = scmp.lt.s32.totalorder %s13, 5
    %p250 = pnand %p248, %p249
    %p251 = pneg %p250
    // Predicated region
    $region45: #{tpu_custom_call.1} parent=5 // pred_check
      _
    $region46: #{tpu_custom_call.1} parent=5 // pred_check_branch
      %253 = sbr.rel (%p250) target = $region48
    $region47: #{tpu_custom_call.1} parent=5 // pred_region
      %s254 = ssub.s32 %s13, 1
      %s255 = smul.u32 2, %s18
      %p256 = scmp.lt.s32.totalorder %s255, 7
      %s257 = scalar_select %p256, %s255, 7
      %s258 = smul.addr %s257, 8
      %s259 = scalar_lea.vmem %s0, %s258
      %p260 = pneg %p39
      %p261 = pneg %p36
      %s262 = smul.u32 2, %s18
      %p263 = scmp.lt.s32.totalorder %s262, 7
      %s264 = scalar_select %p263, %s262, 7
      %s265 = smul.addr %s264, 8
      %s266 = scalar_lea.vmem %s1, %s265
      %p267 = pneg %p65
      %p268 = pneg %p62
      %p269 = pneg %p86
      %p270 = pneg %p83
      %p271 = pneg %p107
      %p272 = pneg %p104
      %p273 = pneg %p128
      %p274 = pneg %p125
      %p275 = pneg %p149
      %p276 = pneg %p146
      %p277 = pneg %p170
      %p278 = pneg %p167
      %p279 = pneg %p196
      %p280 = pneg %p193
      %s281 = smul.u32 2, %s18
      %p282 = scmp.lt.s32.totalorder %s281, 7
      %s283 = scalar_select %p282, %s281, 7
      %s284 = smul.addr %s283, 8
      %s285 = scalar_lea.vmem %s7, %s284
      %s286 = smul.u32 2, %s18
      %p287 = scmp.lt.s32.totalorder %s286, 7
      %s288 = scalar_select %p287, %s286, 7
      %s289 = smul.addr %s288, 8
      %s290 = scalar_lea.vmem %s0, %s289
      %s291 = smul.u32 2, %s18
      %s292 = smul.u32 2, %s18
      %p293 = scmp.lt.s32.totalorder %s292, 7
      %s294 = scalar_select %p293, %s292, 7
      %s295 = smul.addr %s294, 8
      %s296 = scalar_lea.vmem %s1, %s295
      %s297 = smul.u32 2, %s18
      %s298 = smul.u32 2, %s18
      %p299 = scmp.lt.s32.totalorder %s298, 7
      %s300 = scalar_select %p299, %s298, 7
      %s301 = smul.addr %s300, 8
      %s302 = scalar_lea.vmem %s7, %s301
      %s303 = smul.u32 2, %s18
      %v304 = vld [vmem:[%s290] sm:$0xff]
      %v305 = vld [vmem:[%s290 + $0x8] sm:$0xff]
      %vm306 = vcmask 261120
      %307 = vst.msk [vmem:[#allocation2] sm:$0xff] %vm306, %v304
      %308 = vst.msk [vmem:[#allocation2 + $0x8] sm:$0xff] %vm306, %v305
      %v309 = vld [vmem:[%s296] sm:$0xff]
      %v310 = vld [vmem:[%s296 + $0x8] sm:$0xff]
      %313 = vrot.lane.b32.xlu0 %v309, 32
      %v314 = vpop.permute.xlu0 %313
      %315 = vrot.lane.b32.xlu0 %v310, 32
      %v316 = vpop.permute.xlu0 %315
      %vm319 = vcmask 457984
      %320 = vst.msk [vmem:[#allocation2] sm:$0xff] %vm319, %v314
      %321 = vst.msk [vmem:[#allocation2 + $0x8] sm:$0xff] %vm319, %v316
      %v322 = vld [vmem:[#allocation2] sm:$0xff]
      %v323 = vld [vmem:[#allocation2 + $0x8] sm:$0xff]
      %v324 = vld [vmem:[%s2] sm:$0xff]
      %v325 = vld [vmem:[%s2 + $0x8] sm:$0xff]
      %v326 = vld [vmem:[%s2 + $0x10] sm:$0xff]
      %v327 = vld [vmem:[%s2 + $0x18] sm:$0xff]
      %v328 = vld [vmem:[%s2 + $0x20] sm:$0xff]
      %v329 = vld [vmem:[%s2 + $0x28] sm:$0xff]
      %v330 = vld [vmem:[%s2 + $0x30] sm:$0xff]
      %v331 = vld [vmem:[%s3] sm:$0x1]
      %v333 = vlaneseq
      %v334 = vshrl.u32 %v333, 7
      %v335 = vsub.s32 0, %v334
      %v336 = vrot.slane %v331, %v335
      %vm338 = vcmask 457728
      %v340 = vsel %vm338, %v322, 0
      %v343 = vsel %vm338, %v323, 0
      %345 = vmatprep.subr.mxu0 0.0
      %346 = vmatpush1.msra.mxu0 0.0
      %347 = vmatprep.subr.mxu0 0.0
      %348 = vmatpush1.msra.mxu0 0.0
      %349 = vmatprep.subr.mxu0 0.0
      %350 = vmatpush1.msra.mxu0 0.0
      %351 = vmatprep.subr.mxu0 0.0
      %352 = vmatpush1.msra.mxu0 0.0
      %353 = vmatprep.subr.mxu0 0.0
      %354 = vmatpush1.msra.mxu0 0.0
      %355 = vmatprep.subr.mxu0 0.0
      %356 = vmatpush1.msra.mxu0 0.0
      %357 = vmatprep.subr.mxu0 0.0
      %358 = vmatpush1.msra.mxu0 0.0
      %359 = vmatprep.subr.mxu0 0.0
      %360 = vmatpush1.msra.mxu0 0.0
      %361 = vmatprep.subr.mxu0 0.0
      %362 = vmatpush1.msra.mxu0 0.0
      %363 = vmatprep.subr.mxu0 0.0
      %364 = vmatpush1.msra.mxu0 %v330
      %365 = vmatprep.subr.mxu0 0.0
      %366 = vmatpush1.msra.mxu0 %v329
      %367 = vmatprep.subr.mxu0 0.0
      %368 = vmatpush1.msra.mxu0 %v328
      %369 = vmatprep.subr.mxu0 0.0
      %370 = vmatpush1.msra.mxu0 %v327
      %371 = vmatprep.subr.mxu0 0.0
      %372 = vmatpush1.msra.mxu0 %v326
      %373 = vmatprep.subr.mxu0 0.0
      %374 = vmatpush1.msra.mxu0 %v325
      %375 = vmatprep.subr.mxu0 0.0
      %376 = vmatpush1.msra.mxu0 %v324
      %377 = vmatprep.subr.mxu0 0.0
      %378 = vmatpush2.msra.mxu0 0.0
      %379 = vmatprep.subr.mxu0 0.0
      %380 = vmatpush2.msra.mxu0 0.0
      %381 = vmatprep.subr.mxu0 0.0
      %382 = vmatpush2.msra.mxu0 0.0
      %383 = vmatprep.subr.mxu0 0.0
      %384 = vmatpush2.msra.mxu0 0.0
      %385 = vmatprep.subr.mxu0 0.0
      %386 = vmatpush2.msra.mxu0 0.0
      %387 = vmatprep.subr.mxu0 0.0
      %388 = vmatpush2.msra.mxu0 0.0
      %389 = vmatprep.subr.mxu0 0.0
      %390 = vmatpush2.msra.mxu0 0.0
      %391 = vmatprep.subr.mxu0 0.0
      %392 = vmatpush2.msra.mxu0 0.0
      %393 = vmatprep.subr.mxu0 0.0
      %394 = vmatpush2.msra.mxu0 0.0
      %395 = vmatprep.subr.mxu0 0.0
      %396 = vmatpush2.msra.mxu0 0.0
      %397 = vmatprep.subr.mxu0 0.0
      %398 = vmatpush2.msra.mxu0 0.0
      %399 = vmatprep.subr.mxu0 0.0
      %400 = vmatpush2.msra.mxu0 0.0
      %401 = vmatprep.subr.mxu0 0.0
      %402 = vmatpush2.msra.mxu0 0.0
      %403 = vmatprep.subr.mxu0 0.0
      %404 = vmatpush2.msra.mxu0 0.0
      %405 = vmatprep.subr.mxu0 0.0
      %406 = vmatpush2.msra.mxu0 0.0
      %407 = vmatprep.subr.mxu0 0.0
      %408 = vmatpush2.msra.mxu0 0.0
      %409 = vmatprep.mubr.f32.mxu0 0.0
      %410 = vmatmul.mubr.f32.gmra.mxu0 %v340
      %v411 = vpop.f32.mrf.mxu0
      %v412 = vadd.f32 %v336, %v411
      %v413 = vpop.f32.mrf.mxu0
      %414 = vmatprep.mubr.f32.mxu0 0.0
      %415 = vmatmul.mubr.f32.gmra.mxu0 %v343
      %v416 = vpop.f32.mrf.mxu0
      %v417 = vadd.f32 %v336, %v416
      %v418 = vpop.f32.mrf.mxu0
      %419 = vdwg.mxu0
      %v420 = vmax.f32 %v412, 0.0
      %v421 = vmax.f32 %v417, 0.0
      %424 = vrot.lane.b32.xlu0 %v412, 120
      %v425 = vpop.permute.xlu0 %424
      %426 = vrot.lane.b32.xlu0 %v417, 120
      %v427 = vpop.permute.xlu0 %426
      %v430 = vmul.f32 %v412, %v425
      %v431 = vmul.f32 %v417, %v427
      %434 = vrot.lane.b32.xlu0 %v430, 64
      %v435 = vpop.permute.xlu0 %434
      %436 = vrot.lane.b32.xlu0 %v431, 64
      %v437 = vpop.permute.xlu0 %436
      %vm440 = vcmask 64512
      %v441 = vsel %vm440, %v435, 0.0
      %442 = vadd.xlane.f32.xlu0 %v441
      %v443 = vpop.xlane.xlu0 %442
      %v444 = vsel %vm440, %v437, 0.0
      %445 = vadd.xlane.f32.xlu0 %v444
      %v446 = vpop.xlane.xlu0 %445
      %v447 = vld [vmem:[%s4] sm:$0xff]
      %v448 = vld [vmem:[%s4 + $0x8] sm:$0xff]
      %v449 = vld [vmem:[%s4 + $0x10] sm:$0xff]
      %v450 = vld [vmem:[%s4 + $0x18] sm:$0xff]
      %v451 = vld [vmem:[%s4 + $0x20] sm:$0xff]
      %v452 = vld [vmem:[%s4 + $0x28] sm:$0xff]
      %v453 = vld [vmem:[%s4 + $0x30] sm:$0xff]
      %v454 = vld [vmem:[%s4 + $0x38] sm:$0xff]
      %v455 = vld [vmem:[%s5] sm:$0x1]
      %v457 = vlaneseq
      %v458 = vshrl.u32 %v457, 7
      %v459 = vsub.s32 0, %v458
      %v460 = vrot.slane %v455, %v459
      %vm462 = vcmask 523264
      %v464 = vsel %vm462, %v420, 0
      %v467 = vsel %vm462, %v421, 0
      %469 = vmatprep.subr.mxu0 0.0
      %470 = vmatpush1.msra.mxu0 0.0
      %471 = vmatprep.subr.mxu0 0.0
      %472 = vmatpush1.msra.mxu0 0.0
      %473 = vmatprep.subr.mxu0 0.0
      %474 = vmatpush1.msra.mxu0 0.0
      %475 = vmatprep.subr.mxu0 0.0
      %476 = vmatpush1.msra.mxu0 0.0
      %477 = vmatprep.subr.mxu0 0.0
      %478 = vmatpush1.msra.mxu0 0.0
      %479 = vmatprep.subr.mxu0 0.0
      %480 = vmatpush1.msra.mxu0 0.0
      %481 = vmatprep.subr.mxu0 0.0
      %482 = vmatpush1.msra.mxu0 0.0
      %483 = vmatprep.subr.mxu0 0.0
      %484 = vmatpush1.msra.mxu0 0.0
      %485 = vmatprep.subr.mxu0 0.0
      %486 = vmatpush1.msra.mxu0 %v454
      %487 = vmatprep.subr.mxu0 0.0
      %488 = vmatpush1.msra.mxu0 %v453
      %489 = vmatprep.subr.mxu0 0.0
      %490 = vmatpush1.msra.mxu0 %v452
      %491 = vmatprep.subr.mxu0 0.0
      %492 = vmatpush1.msra.mxu0 %v451
      %493 = vmatprep.subr.mxu0 0.0
      %494 = vmatpush1.msra.mxu0 %v450
      %495 = vmatprep.subr.mxu0 0.0
      %496 = vmatpush1.msra.mxu0 %v449
      %497 = vmatprep.subr.mxu0 0.0
      %498 = vmatpush1.msra.mxu0 %v448
      %499 = vmatprep.subr.mxu0 0.0
      %500 = vmatpush1.msra.mxu0 %v447
      %501 = vmatprep.subr.mxu0 0.0
      %502 = vmatpush2.msra.mxu0 0.0
      %503 = vmatprep.subr.mxu0 0.0
      %504 = vmatpush2.msra.mxu0 0.0
      %505 = vmatprep.subr.mxu0 0.0
      %506 = vmatpush2.msra.mxu0 0.0
      %507 = vmatprep.subr.mxu0 0.0
      %508 = vmatpush2.msra.mxu0 0.0
      %509 = vmatprep.subr.mxu0 0.0
      %510 = vmatpush2.msra.mxu0 0.0
      %511 = vmatprep.subr.mxu0 0.0
      %512 = vmatpush2.msra.mxu0 0.0
      %513 = vmatprep.subr.mxu0 0.0
      %514 = vmatpush2.msra.mxu0 0.0
      %515 = vmatprep.subr.mxu0 0.0
      %516 = vmatpush2.msra.mxu0 0.0
      %517 = vmatprep.subr.mxu0 0.0
      %518 = vmatpush2.msra.mxu0 0.0
      %519 = vmatprep.subr.mxu0 0.0
      %520 = vmatpush2.msra.mxu0 0.0
      %521 = vmatprep.subr.mxu0 0.0
      %522 = vmatpush2.msra.mxu0 0.0
      %523 = vmatprep.subr.mxu0 0.0
      %524 = vmatpush2.msra.mxu0 0.0
      %525 = vmatprep.subr.mxu0 0.0
      %526 = vmatpush2.msra.mxu0 0.0
      %527 = vmatprep.subr.mxu0 0.0
      %528 = vmatpush2.msra.mxu0 0.0
      %529 = vmatprep.subr.mxu0 0.0
      %530 = vmatpush2.msra.mxu0 0.0
      %531 = vmatprep.subr.mxu0 0.0
      %532 = vmatpush2.msra.mxu0 0.0
      %533 = vmatprep.mubr.f32.mxu0 0.0
      %534 = vmatmul.mubr.f32.gmra.mxu0 %v464
      %v535 = vpop.f32.mrf.mxu0
      %v536 = vadd.f32 %v460, %v535
      %v537 = vpop.f32.mrf.mxu0
      %538 = vmatprep.mubr.f32.mxu0 0.0
      %539 = vmatmul.mubr.f32.gmra.mxu0 %v467
      %v540 = vpop.f32.mrf.mxu0
      %v541 = vadd.f32 %v460, %v540
      %v542 = vpop.f32.mrf.mxu0
      %543 = vdwg.mxu0
      %v544 = vmax.f32 %v536, 0.0
      %v545 = vmax.f32 %v541, 0.0
      %v546 = vld [vmem:[%s6] sm:$0x1]
      %v548 = vlaneseq
      %v549 = vshrl.u32 %v548, 7
      %v550 = vsub.s32 0, %v549
      %v551 = vrot.slane %v546, %v550
      %v553 = vmul.f32 %v544, %v551
      %v554 = vmul.f32 %v545, %v551
      %v555 = vsel %vm306, %v553, 0.0
      %556 = vadd.xlane.f32.xlu0 %v555
      %v557 = vpop.xlane.xlu0 %556
      %v558 = vsel %vm306, %v554, 0.0
      %559 = vadd.xlane.f32.xlu0 %v558
      %v560 = vpop.xlane.xlu0 %559
      %v561 = vadd.f32 %v557, %v412
      %v562 = vadd.f32 %v560, %v417
      %v563 = vadd.f32 %v561, %v443
      %v564 = vadd.f32 %v562, %v446
      %567 = vrot.lane.b32.xlu0 %v563, 48
      %v568 = vpop.permute.xlu0 %567
      %569 = vrot.lane.b32.xlu0 %v564, 48
      %v570 = vpop.permute.xlu0 %569
      %vm573 = vcmask 7168
      %574 = vst.msk [vmem:[%s302] sm:$0xff] %vm573, %v568
      %575 = vst.msk [vmem:[%s302 + $0x8] sm:$0xff] %vm573, %v570
      %s576 = smul.u32 2, %s18
      %p577 = scmp.lt.s32.totalorder %s576, 7
      %s578 = scalar_select %p577, %s576, 7
      %s579 = smul.addr %s578, 8
      %s580 = scalar_lea.vmem %s7, %s579
      // Predicated region
      $region49: #{tpu_custom_call.1} parent=47 // pred_check
        %p581 = pneg %p193
      $region50: #{tpu_custom_call.1} parent=47 // pred_check_branch
        %583 = sbr.rel (%p581) target = $region52
      $region51: #{tpu_custom_call.1} parent=47 // pred_region
        %s584 = smul.u32 2, %s18
      $region52: #{tpu_custom_call.1} parent=47 // pred_fallthru
        _
    $region48: #{tpu_custom_call.1} parent=5 // pred_fallthru
      _
    %p585 = scmp.le.s32.totalorder 2, %s13
    // Predicated region
    $region53: #{tpu_custom_call.1} parent=5 // pred_check
      %p586 = pneg %p585
    $region54: #{tpu_custom_call.1} parent=5 // pred_check_branch
      %588 = sbr.rel (%p586) target = $region56
    $region55: #{tpu_custom_call.1} parent=5 // pred_region
      %s589 = ssub.s32 %s13, 2
      // Predicated region
      $region57: #{tpu_custom_call.1} parent=55 // pred_check
        %p590 = pneg %p199
      $region58: #{tpu_custom_call.1} parent=55 // pred_check_branch
        %592 = sbr.rel (%p590) target = $region60
      $region59: #{tpu_custom_call.1} parent=55 // pred_region
        %s593 = smul.u32 2, %s19
        %p594 = scmp.lt.s32.totalorder %s593, 7
        %s595 = scalar_select %p594, %s593, 7
        %s596 = smul.addr %s595, 8
        %s597 = scalar_lea.vmem %s7, %s596
      $region60: #{tpu_custom_call.1} parent=55 // pred_fallthru
        _
    $region56: #{tpu_custom_call.1} parent=5 // pred_fallthru
      _
  $region6: #{tpu_custom_call.1} parent=0 // loop_footer
    %s17 = sadd.s32 1, %s13
  $region7: #{tpu_custom_call.1} parent=0 // loop_footer_branch
    %12 = sbr.rel target = $region3
  $region8: #{tpu_custom_call.1} parent=0 // loop_exit
    _

</llo_original>
